<compile_context>
chip_gen: v7x
topology: tpu7x:2x2x1
jax: 0.10.0
libtpu: 0.0.40
codegen_flags: <defaults>
</compile_context>

<pallas_src>
import jax
import jax.numpy as jnp
from jax.experimental import pallas as pl
from jax.experimental.pallas import tpu as pltpu


# ----------------------------------------------------------------------------
# Helpers
# ----------------------------------------------------------------------------
def _round_up(x: int, m: int) -> int:
    return (x + m - 1) // m * m


def _cdiv(a: int, b: int) -> int:
    return (a + b - 1) // b


def _sublane_min(dtype) -> int:
    # (sublane, lane) minimum tile second-to-last dim per dtype width.
    return {4: 8, 2: 16, 1: 32}.get(jnp.dtype(dtype).itemsize, 8)


def _vmem_capacity_bytes() -> int:
    try:
        return int(pltpu.get_tpu_info().vmem_capacity_bytes)
    except Exception:
        return 64 << 20  # conservative: v7x per-TensorCore VMEM


def _pad2(a, rows: int, cols: int):
    pr, pc = rows - a.shape[0], cols - a.shape[1]
    if pr == 0 and pc == 0:
        return a
    return jnp.pad(a, ((0, pr), (0, pc)))


def _block_spec(shape, index_map, single_buffer: bool = False):
    # Single-buffer a spec whose block index never changes (no re-fetch needed).
    if single_buffer and hasattr(pl, "Buffered"):
        try:
            return pl.BlockSpec(shape, index_map, pipeline_mode=pl.Buffered(1))
        except TypeError:
            pass
    return pl.BlockSpec(shape, index_map)


# ----------------------------------------------------------------------------
# Kernels
# ----------------------------------------------------------------------------
def _td_linear_kernel(x_ref, w_ref, b_ref, o_ref):
    # x: (TM, K)  w: (K, TN)  b: (1, TN)  o: (TM, TN)   (K untiled)
    acc = jnp.dot(x_ref[...], w_ref[...], preferred_element_type=jnp.float32)
    o_ref[...] = (acc + b_ref[...].astype(jnp.float32)).astype(o_ref.dtype)


def _td_linear_kernel_ktiled(x_ref, w_ref, b_ref, o_ref, acc_ref):
    # Grid: (i, j, k) with k innermost ("arbitrary"); acc_ref: (TM, TN) f32.
    k = pl.program_id(2)

    @pl.when(k == 0)
    def _():
        acc_ref[...] = jnp.zeros_like(acc_ref)

    acc_ref[...] += jnp.dot(x_ref[...], w_ref[...],
                            preferred_element_type=jnp.float32)

    @pl.when(k == pl.num_programs(2) - 1)
    def _():
        o_ref[...] = (acc_ref[...] + b_ref[...].astype(jnp.float32)
                      ).astype(o_ref.dtype)


# ----------------------------------------------------------------------------
# Wrapper: TimeDistributed(Linear) forward
# ----------------------------------------------------------------------------
def time_distributed_linear(x, weight, bias, *, tm_max=None, tn_max=512,
                            tk_max=2048):
    """y[b, t, :] = x[b, t, :] @ weight + bias   for every (b, t).

    x:      (batch, time, in_features)
    weight: (in_features, out_features)
    bias:   (out_features,)
    returns (batch, time, out_features)
    """
    batch, time, in_f = x.shape
    out_f = weight.shape[1]
    m = batch * time

    x_item = jnp.dtype(x.dtype).itemsize
    w_item = jnp.dtype(weight.dtype).itemsize
    b_item = jnp.dtype(bias.dtype).itemsize
    o_item = x_item
    sub = _sublane_min(x.dtype)

    # --- Per-generation VMEM budgeting. -------------------------------------
    vmem_cap = _vmem_capacity_bytes()
    budget = (vmem_cap * 5) // 8          # planning budget, headroom for compiler
    if tm_max is None:
        tm_max = 1024 if vmem_cap >= (96 << 20) else 512

    m_aligned = _round_up(m, sub)
    in_lane = _round_up(in_f, 128)
    out_lane = _round_up(out_f, 128)

    tm = min(_round_up(tm_max, sub), m_aligned)
    tn = min(_round_up(tn_max, 128), out_lane)
    tk = min(_round_up(tk_max, 128), in_lane)

    def _single_buffer_ok(w_tile_bytes, k_tiles, j_tiles):
        return (k_tiles == 1 and j_tiles == 1 and w_tile_bytes >= (1 << 20)
                and hasattr(pl, "Buffered"))

    def _plan_bytes(tm_, tk_, tn_):
        k_tiles = _cdiv(in_lane, tk_)
        j_tiles = _cdiv(out_lane, tn_)
        w_tile = tk_ * tn_ * w_item
        w_bufs = 1 if _single_buffer_ok(w_tile, k_tiles, j_tiles) else 2
        total = (2 * tm_ * tk_ * x_item        # activations (double-buffered)
                 + w_bufs * w_tile             # weight
                 + 2 * tn_ * b_item            # bias
                 + 2 * tm_ * tn_ * o_item)     # output
        if k_tiles > 1:
            total += tm_ * tn_ * 4             # f32 accumulator scratch
        return total

    # Shrink tiles until the working set fits. Prefer K-tiling over starving
    # the MXU of M rows (keep tm >= ~256 before shrinking tk, then go lower).
    tm_floor_pref = min(tm, max(sub, 256))
    while _plan_bytes(tm, tk, tn) > budget:
        if tm > tm_floor_pref:
            tm = max(sub, (tm // 2) // sub * sub)
        elif tk > 128:
            tk = max(128, _round_up(tk // 2, 128))
        elif tm > sub:
            tm = max(sub, (tm // 2) // sub * sub)
        elif tn > 128:
            tn = max(128, _round_up(tn // 2, 128))
        else:
            break

    in_p = _round_up(in_f, tk)
    out_p = _round_up(out_f, tn)
    k_tiles = in_p // tk
    j_tiles = out_p // tn

    # --- M tiling: balanced tiles, minimal padding, >=2 tiles when worthwhile.
    i_tiles = _cdiv(m_aligned, tm)
    if (i_tiles * j_tiles == 1 and m_aligned >= 2 * sub
            and m * in_p * out_p >= (1 << 24)):
        i_tiles = 2                     # keep both v7x TensorCores busy
    tm = _round_up(_cdiv(m_aligned, i_tiles), sub)
    m_p = tm * i_tiles

    # --- Fold + pad (no-op when already aligned). ----------------------------
    x_p = _pad2(x.reshape(m, in_f), m_p, in_p)
    w_p = _pad2(weight, in_p, out_p)
    b_p = _pad2(bias.reshape(1, out_f), 1, out_p)

    single_w = _single_buffer_ok(tk * tn * w_item, k_tiles, j_tiles)

    a_bytes = m_p * in_p * x_item       # one full activation pass
    w_bytes = in_p * out_p * w_item     # one full weight pass
    o_bytes = m_p * out_p * o_item

    if k_tiles == 1:
        # Choose grid order so the operand that would be re-fetched more bytes
        # sits on the slow axis (its block index then only changes slowly /
        # not at all, and Pallas skips the re-DMA).
        cost_m_outer = a_bytes + i_tiles * w_bytes   # (i, j): weight refetched per i
        cost_n_outer = w_bytes + j_tiles * a_bytes   # (j, i): acts refetched per j
        if cost_m_outer <= cost_n_outer:
            grid = (i_tiles, j_tiles)
            in_specs = [
                pl.BlockSpec((tm, in_p), lambda i, j: (i, 0)),
                _block_spec((in_p, tn), lambda i, j: (0, j), single_w),
                _block_spec((1, tn), lambda i, j: (0, j), single_w),
            ]
            out_spec = pl.BlockSpec((tm, tn), lambda i, j: (i, j))
            bytes_accessed = cost_m_outer + o_bytes
        else:
            grid = (j_tiles, i_tiles)
            in_specs = [
                pl.BlockSpec((tm, in_p), lambda j, i: (i, 0)),
                _block_spec((in_p, tn), lambda j, i: (0, j), single_w),
                _block_spec((1, tn), lambda j, i: (0, j), single_w),
            ]
            out_spec = pl.BlockSpec((tm, tn), lambda j, i: (i, j))
            bytes_accessed = cost_n_outer + o_bytes
        kernel = _td_linear_kernel
        scratch_shapes = ()
        dim_sem = ("parallel", "parallel")
    else:
        grid = (i_tiles, j_tiles, k_tiles)
        in_specs = [
            pl.BlockSpec((tm, tk), lambda i, j, k: (i, k)),
            pl.BlockSpec((tk, tn), lambda i, j, k: (k, j)),
            pl.BlockSpec((1, tn), lambda i, j, k: (0, j)),
        ]
        out_spec = pl.BlockSpec((tm, tn), lambda i, j, k: (i, j))
        kernel = _td_linear_kernel_ktiled
        scratch_shapes = (pltpu.VMEM((tm, tn), jnp.float32),)
        bytes_accessed = j_tiles * a_bytes + i_tiles * w_bytes + o_bytes
        dim_sem = ("parallel", "parallel", "arbitrary")

    plan = _plan_bytes(tm, tk, tn)
    vmem_limit = int(max(32 << 20, min(vmem_cap - (4 << 20), plan + (8 << 20))))

    cost = pl.CostEstimate(
        flops=2 * m_p * in_p * out_p,
        transcendentals=0,
        bytes_accessed=int(bytes_accessed),
    )

    y_p = pl.pallas_call(
        kernel,
        out_shape=jax.ShapeDtypeStruct((m_p, out_p), x.dtype),
        grid=grid,
        in_specs=in_specs,
        out_specs=out_spec,
        scratch_shapes=scratch_shapes,
        compiler_params=pltpu.CompilerParams(
            dimension_semantics=dim_sem,
            vmem_limit_bytes=vmem_limit,
        ),
        cost_estimate=cost,
    )(x_p, w_p, b_p)

    # --- Slice off padding, TimeDistributed unfold. --------------------------
    return y_p[:m, :out_f].reshape(batch, time, out_f)


# ----------------------------------------------------------------------------
# Self-test
# ----------------------------------------------------------------------------
if __name__ == "__main__":
    key = jax.random.PRNGKey(0)
    keys = jax.random.split(key, 12)

    # 1) Small shapes consistent with TimeDistributed(Linear).
    batch, time, in_features, out_features = 2, 8, 32, 64
    x = jax.random.normal(keys[0], (batch, time, in_features), dtype=jnp.float32)
    bound = 1.0 / (in_features ** 0.5)
    weight = jax.random.uniform(keys[1], (in_features, out_features),
                                minval=-bound, maxval=bound, dtype=jnp.float32)
    bias = jax.random.uniform(keys[2], (out_features,),
                              minval=-bound, maxval=bound, dtype=jnp.float32)
    y = time_distributed_linear(x, weight, bias)
    jax.block_until_ready(y)
    y_ref = (x.reshape(batch * time, in_features) @ weight + bias
             ).reshape(batch, time, out_features)
    assert y.shape == (batch, time, out_features)
    assert jnp.allclose(y, y_ref, atol=1e-5, rtol=1e-5)

    # 2) Multi-M-tile path (M > TM), multi-core split, aligned features.
    b2, t2, f2, o2 = 4, 160, 256, 384
    x2 = jax.random.normal(keys[3], (b2, t2, f2), dtype=jnp.float32)
    bound2 = 1.0 / (f2 ** 0.5)
    w2 = jax.random.uniform(keys[4], (f2, o2), minval=-bound2, maxval=bound2,
                            dtype=jnp.float32)
    bb2 = jax.random.uniform(keys[5], (o2,), minval=-bound2, maxval=bound2,
                             dtype=jnp.float32)
    y2 = time_distributed_linear(x2, w2, bb2)
    jax.block_until_ready(y2)
    y2_ref = (x2.reshape(b2 * t2, f2) @ w2 + bb2).reshape(b2, t2, o2)
    assert jnp.allclose(y2, y2_ref, atol=1e-4, rtol=1e-4)

    # 3) K-tiled accumulator path + multiple N tiles + ragged M (forced small
    #    tile caps so the test stays tiny).
    b3, t3, f3, o3 = 3, 20, 256, 256
    x3 = jax.random.normal(keys[6], (b3, t3, f3), dtype=jnp.float32)
    bound3 = 1.0 / (f3 ** 0.5)
    w3 = jax.random.uniform(keys[7], (f3, o3), minval=-bound3, maxval=bound3,
                            dtype=jnp.float32)
    bb3 = jax.random.uniform(keys[8], (o3,), minval=-bound3, maxval=bound3,
                             dtype=jnp.float32)
    y3 = time_distributed_linear(x3, w3, bb3, tk_max=128, tn_max=128)
    jax.block_until_ready(y3)
    y3_ref = (x3.reshape(b3 * t3, f3) @ w3 + bb3).reshape(b3, t3, o3)
    assert jnp.allclose(y3, y3_ref, atol=1e-4, rtol=1e-4)

    # 4) bf16 path (16-row sublane minimum).
    b4, t4, f4, o4 = 2, 12, 64, 96
    x4 = jax.random.normal(keys[9], (b4, t4, f4), dtype=jnp.bfloat16)
    bound4 = 1.0 / (f4 ** 0.5)
    w4 = jax.random.uniform(keys[10], (f4, o4), minval=-bound4, maxval=bound4,
                            dtype=jnp.bfloat16)
    bb4 = jax.random.uniform(keys[11], (o4,), minval=-bound4, maxval=bound4,
                             dtype=jnp.bfloat16)
    y4 = time_distributed_linear(x4, w4, bb4)
    jax.block_until_ready(y4)
    y4_ref = (x4.reshape(b4 * t4, f4).astype(jnp.float32)
              @ w4.astype(jnp.float32) + bb4.astype(jnp.float32)
              ).reshape(b4, t4, o4)
    assert jnp.allclose(y4.astype(jnp.float32), y4_ref, atol=3e-2, rtol=3e-2)

    print("KERNEL_OK")
</pallas_src>

<mosaic_0001>
module attributes {stable_mosaic.version = 11 : i64} {
  func.func @_td_linear_kernel(%arg0: i32, %arg1: i32, %arg2: memref<16x128xf32, #tpu.memory_space<vmem>>, %arg3: memref<128x128xf32, #tpu.memory_space<vmem>>, %arg4: memref<1x128xf32, #tpu.memory_space<vmem>>, %arg5: memref<16x128xf32, #tpu.memory_space<vmem>>) attributes {dimension_semantics = [#tpu.dimension_semantics<parallel>, #tpu.dimension_semantics<parallel>], iteration_bounds = array<i64: 1, 1>, scalar_prefetch = 0 : i64, scratch_operands = 0 : i64, tpu.core_type = #tpu.core_type<tc>, window_params = [{transform_indices = @transform_0, window_bounds = array<i64: 16, 128>}, {transform_indices = @transform_1, window_bounds = array<i64: 128, 128>}, {transform_indices = @transform_2, window_bounds = array<i64: 1, 128>}, {transform_indices = @transform_3, window_bounds = array<i64: 16, 128>}]} {
    %c0 = arith.constant 0 : index
    %c0_0 = arith.constant 0 : index
    %0 = vector.load %arg2[%c0, %c0_0] : memref<16x128xf32, #tpu.memory_space<vmem>>, vector<16x128xf32>
    %c0_1 = arith.constant 0 : index
    %c0_2 = arith.constant 0 : index
    %1 = vector.load %arg3[%c0_1, %c0_2] : memref<128x128xf32, #tpu.memory_space<vmem>>, vector<128x128xf32>
    %cst = arith.constant dense<0.000000e+00> : vector<16x128xf32>
    %2 = tpu.matmul %0, %1, %cst {dimension_numbers = #tpu.dot_dimension_numbers<[1], [0], [0], [1], [0, 0, 1, 1], [], []>} : vector<16x128xf32>, vector<128x128xf32>, vector<16x128xf32> -> vector<16x128xf32>
    %c0_3 = arith.constant 0 : index
    %c0_4 = arith.constant 0 : index
    %3 = vector.load %arg4[%c0_3, %c0_4] : memref<1x128xf32, #tpu.memory_space<vmem>>, vector<1x128xf32>
    %4 = vector.broadcast %3 : vector<1x128xf32> to vector<16x128xf32>
    %5 = arith.addf %2, %4 : vector<16x128xf32>
    %c0_5 = arith.constant 0 : index
    %c0_6 = arith.constant 0 : index
    %6 = vector.load %arg5[%c0_5, %c0_6] : memref<16x128xf32, #tpu.memory_space<vmem>>, vector<16x128xf32>
    tpu.vector_store %arg5[%c0_5, %c0_6], %5 {strides = array<i32>} : memref<16x128xf32, #tpu.memory_space<vmem>>, vector<16x128xf32>,
    return
  }
  func.func @transform_0(%arg0: i32, %arg1: i32) -> (i32, i32) {
    %c0_i32 = arith.constant 0 : i32
    %c0_i32_0 = arith.constant 0 : i32
    return %arg0, %c0_i32 : i32, i32
  }
  func.func @transform_1(%arg0: i32, %arg1: i32) -> (i32, i32) {
    %c0_i32 = arith.constant 0 : i32
    %c0_i32_0 = arith.constant 0 : i32
    return %c0_i32, %arg1 : i32, i32
  }
  func.func @transform_2(%arg0: i32, %arg1: i32) -> (i32, i32) {
    %c0_i32 = arith.constant 0 : i32
    %c0_i32_0 = arith.constant 0 : i32
    return %c0_i32, %arg1 : i32, i32
  }
  func.func @transform_3(%arg0: i32, %arg1: i32) -> (i32, i32) {
    %c0_i32 = arith.constant 0 : i32
    return %arg0, %arg1 : i32, i32
  }
}

</mosaic_0001>

<llo_original>
// kernel: tpu_custom_call.1
$region0: #{tpu_custom_call.1}
  #allocation0 [shape = 'u32[]', space=smem, size = 0x4, offset = 0x4, fixed_abs, tag = 'smem constant byte address 0x4 - core index']
  #allocation1 [shape = 'u32[144,128]{1,0:T(1,128)}', space=vmem, size = 0x12000, scoped, tag = 'internal scratch']
  %s0 = inlined_call_operand.hbm [shape: f32[16,128], index: 0, kind: input, shape index: {}]
  %s1 = inlined_call_operand.hbm [shape: f32[128,128], index: 1, kind: input, shape index: {}]
  %s2 = inlined_call_operand.vmem [shape: f32[1,128], index: 2, kind: input, shape index: {}]
  %s3 = inlined_call_operand.hbm [shape: f32[16,128], index: 3, kind: output, shape index: {}]
  %s4 = sld [smem:[#allocation0]]
  $region30: #{tpu_custom_call.1} parent=0
    _
  %s6 = ssub.s32 1, %s4
  %s7 = scalar_select 0, %s6, %s4
  $region1: #{tpu_custom_call.1} parent=0
    #allocation2 [shape = 'u8[8192]{0}', space=vmem, size = 0x2000, scoped, tag = 'input window, operand 0, single buffered']
    #allocation3 [shape = 's32[1]{0}', space=sflag, size = 0x4, scoped, tag = 'scoped memory for tpu_custom_call.1']
    #allocation4 [shape = 's32[1]{0}', space=sflag, size = 0x4, scoped, tag = 'scoped memory for tpu_custom_call.1']
    #allocation5 [shape = 'u8[65536]{0}', space=vmem, size = 0x10000, scoped, tag = 'input window, operand 1, single buffered']
    #allocation6 [shape = 's32[1]{0}', space=sflag, size = 0x4, scoped, tag = 'scoped memory for tpu_custom_call.1']
    #allocation7 [shape = 'u8[8192]{0}', space=vmem, size = 0x2000, scoped, tag = 'output window, operand 0, single buffered']
    %8 = vsyncpa [#allocation3], 0
    %9 = vsyncpa [#allocation6], 0
    %10 = vsyncpa [#allocation4], 0
    // Predicated region
    $region2: #{tpu_custom_call.1} parent=1 // pred_check
      _
    $region3: #{tpu_custom_call.1} parent=1 // pred_check_branch
      %12 = sbr.rel (0) target = $region5
    $region4: #{tpu_custom_call.1} parent=1 // pred_region
      %s14 = ssub.s32 256, 256
      %15 = vsyncadd [#allocation3], %s14
      %s16 = sshll.u32 [#allocation2], 4
      %s17 = int_to_ptr.vmem [resolvable:$true] %s16
      %22 = dma.hbm_to_vmem [thread:$0]  %s0, 256, %s17, [#allocation3], 128, 128, 8
    $region5: #{tpu_custom_call.1} parent=1 // pred_fallthru
      _
    // Predicated region
    $region6: #{tpu_custom_call.1} parent=1 // pred_check
      _
    $region7: #{tpu_custom_call.1} parent=1 // pred_check_branch
      %24 = sbr.rel (0) target = $region9
    $region8: #{tpu_custom_call.1} parent=1 // pred_region
      %s26 = ssub.s32 2048, 2048
      %27 = vsyncadd [#allocation6], %s26
      %s28 = sshll.u32 [#allocation5], 4
      %s29 = int_to_ptr.vmem [resolvable:$true] %s28
      %34 = dma.hbm_to_vmem [thread:$0]  %s1, 2048, %s29, [#allocation6], 128, 128, 8
    $region9: #{tpu_custom_call.1} parent=1 // pred_fallthru
      _
    // Predicated region
    $region10: #{tpu_custom_call.1} parent=1 // pred_check
      _
    $region11: #{tpu_custom_call.1} parent=1 // pred_check_branch
      %36 = sbr.rel (0) target = $region13
    $region12: #{tpu_custom_call.1} parent=1 // pred_region
      _
    $region13: #{tpu_custom_call.1} parent=1 // pred_fallthru
      _
    // Predicated region
    $region14: #{tpu_custom_call.1} parent=1 // pred_check
      _
    $region15: #{tpu_custom_call.1} parent=1 // pred_check_branch
      %38 = sbr.rel (0) target = $region17
    $region16: #{tpu_custom_call.1} parent=1 // pred_region
      %39 = dma.done [#allocation3], 256
    $region17: #{tpu_custom_call.1} parent=1 // pred_fallthru
      _
    // Predicated region
    $region18: #{tpu_custom_call.1} parent=1 // pred_check
      _
    $region19: #{tpu_custom_call.1} parent=1 // pred_check_branch
      %41 = sbr.rel (0) target = $region21
    $region20: #{tpu_custom_call.1} parent=1 // pred_region
      %42 = dma.done [#allocation6], 2048
    $region21: #{tpu_custom_call.1} parent=1 // pred_fallthru
      _
    %v43 = vld [vmem:[#allocation2] sm:$0xff]
    %v44 = vld [vmem:[#allocation2 + $0x8] sm:$0xff]
    %v45 = vld [vmem:[#allocation5] sm:$0xff]
    %v46 = vld [vmem:[#allocation5 + $0x8] sm:$0xff]
    %v47 = vld [vmem:[#allocation5 + $0x10] sm:$0xff]
    %v48 = vld [vmem:[#allocation5 + $0x18] sm:$0xff]
    %v49 = vld [vmem:[#allocation5 + $0x20] sm:$0xff]
    %v50 = vld [vmem:[#allocation5 + $0x28] sm:$0xff]
    %v51 = vld [vmem:[#allocation5 + $0x30] sm:$0xff]
    %v52 = vld [vmem:[#allocation5 + $0x38] sm:$0xff]
    %v53 = vld [vmem:[#allocation5 + $0x40] sm:$0xff]
    %v54 = vld [vmem:[#allocation5 + $0x48] sm:$0xff]
    %v55 = vld [vmem:[#allocation5 + $0x50] sm:$0xff]
    %v56 = vld [vmem:[#allocation5 + $0x58] sm:$0xff]
    %v57 = vld [vmem:[#allocation5 + $0x60] sm:$0xff]
    %v58 = vld [vmem:[#allocation5 + $0x68] sm:$0xff]
    %v59 = vld [vmem:[#allocation5 + $0x70] sm:$0xff]
    %v60 = vld [vmem:[#allocation5 + $0x78] sm:$0xff]
    %v61 = vld [vmem:[%s2] sm:$0x1]
    %v63 = vlaneseq
    %v64 = vshrl.u32 %v63, 7
    %v65 = vsub.s32 0, %v64
    %v66 = vrot.slane %v61, %v65
    %68 = vmatprep.subr.mxu0 0.0
    %69 = vmatpush1.msra.mxu0 %v45
    %70 = vmatprep.subr.mxu0 0.0
    %71 = vmatpush1.msra.mxu0 %v46
    %72 = vmatprep.subr.mxu0 0.0
    %73 = vmatpush1.msra.mxu0 %v47
    %74 = vmatprep.subr.mxu0 0.0
    %75 = vmatpush1.msra.mxu0 %v48
    %76 = vmatprep.subr.mxu0 0.0
    %77 = vmatpush1.msra.mxu0 %v49
    %78 = vmatprep.subr.mxu0 0.0
    %79 = vmatpush1.msra.mxu0 %v50
    %80 = vmatprep.subr.mxu0 0.0
    %81 = vmatpush1.msra.mxu0 %v51
    %82 = vmatprep.subr.mxu0 0.0
    %83 = vmatpush1.msra.mxu0 %v52
    %84 = vmatprep.subr.mxu0 0.0
    %85 = vmatpush1.msra.mxu0 %v53
    %86 = vmatprep.subr.mxu0 0.0
    %87 = vmatpush1.msra.mxu0 %v54
    %88 = vmatprep.subr.mxu0 0.0
    %89 = vmatpush1.msra.mxu0 %v55
    %90 = vmatprep.subr.mxu0 0.0
    %91 = vmatpush1.msra.mxu0 %v56
    %92 = vmatprep.subr.mxu0 0.0
    %93 = vmatpush1.msra.mxu0 %v57
    %94 = vmatprep.subr.mxu0 0.0
    %95 = vmatpush1.msra.mxu0 %v58
    %96 = vmatprep.subr.mxu0 0.0
    %97 = vmatpush1.msra.mxu0 %v59
    %98 = vmatprep.subr.mxu0 0.0
    %99 = vmatpush1.msra.mxu0 %v60
    %100 = vmatprep.subr.mxu0 0.0
    %101 = vmatpush1.msra.mxu0 0.0
    %102 = vmatprep.subr.mxu0 0.0
    %103 = vmatpush1.msra.mxu0 0.0
    %104 = vmatprep.subr.mxu0 0.0
    %105 = vmatpush1.msra.mxu0 0.0
    %106 = vmatprep.subr.mxu0 0.0
    %107 = vmatpush1.msra.mxu0 0.0
    %108 = vmatprep.subr.mxu0 0.0
    %109 = vmatpush1.msra.mxu0 0.0
    %110 = vmatprep.subr.mxu0 0.0
    %111 = vmatpush1.msra.mxu0 0.0
    %112 = vmatprep.subr.mxu0 0.0
    %113 = vmatpush1.msra.mxu0 0.0
    %114 = vmatprep.subr.mxu0 0.0
    %115 = vmatpush1.msra.mxu0 0.0
    %116 = vmatprep.subr.mxu0 0.0
    %117 = vmatpush1.msra.mxu0 0.0
    %118 = vmatprep.subr.mxu0 0.0
    %119 = vmatpush1.msra.mxu0 0.0
    %120 = vmatprep.subr.mxu0 0.0
    %121 = vmatpush1.msra.mxu0 0.0
    %122 = vmatprep.subr.mxu0 0.0
    %123 = vmatpush1.msra.mxu0 0.0
    %124 = vmatprep.subr.mxu0 0.0
    %125 = vmatpush1.msra.mxu0 0.0
    %126 = vmatprep.subr.mxu0 0.0
    %127 = vmatpush1.msra.mxu0 0.0
    %128 = vmatprep.subr.mxu0 0.0
    %129 = vmatpush1.msra.mxu0 0.0
    %130 = vmatprep.subr.mxu0 0.0
    %131 = vmatpush1.msra.mxu0 0.0
    %132 = vmatprep.mubr.f32.mxu0 0.0
    %133 = vmatmul.mubr.f32.gmra.mrb[0].mxu0 %v43
    %v134 = vpop.f32.mrb[0].mxu0
    %v135 = vadd.f32 %v66, %v134
    %v136 = vpop.f32.mrb[0].mxu0
    %137 = vmatprep.mubr.f32.mxu0 0.0
    %138 = vmatmul.mubr.f32.gmra.mrb[0].mxu0 %v44
    %v139 = vpop.f32.mrb[0].mxu0
    %v140 = vadd.f32 %v66, %v139
    %v141 = vpop.f32.mrb[0].mxu0
    %142 = vdwg.mxu0
    %143 = vst [vmem:[#allocation7] sm:$0xff] %v135
    %144 = vst [vmem:[#allocation7 + $0x8] sm:$0xff] %v140
    // Predicated region
    $region22: #{tpu_custom_call.1} parent=1 // pred_check
      _
    $region23: #{tpu_custom_call.1} parent=1 // pred_check_branch
      %146 = sbr.rel (0) target = $region25
    $region24: #{tpu_custom_call.1} parent=1 // pred_region
      %s148 = ssub.s32 256, 256
      %149 = vsyncadd [#allocation4], %s148
      %s150 = sshll.u32 [#allocation7], 4
      %s151 = int_to_ptr.vmem [resolvable:$true] %s150
      %156 = dma.vmem_to_hbm [thread:$0]  %s151, 256, %s3, [#allocation4], 128, 128, 8
    $region25: #{tpu_custom_call.1} parent=1 // pred_fallthru
      _
    // Predicated region
    $region26: #{tpu_custom_call.1} parent=1 // pred_check
      _
    $region27: #{tpu_custom_call.1} parent=1 // pred_check_branch
      %158 = sbr.rel (0) target = $region29
    $region28: #{tpu_custom_call.1} parent=1 // pred_region
      %159 = dma.done [#allocation4], 256
    $region29: #{tpu_custom_call.1} parent=1 // pred_fallthru
      _
    %160 = vsyncpa [#allocation3], 1
    %161 = vsyncpa [#allocation6], 1
    %162 = vsyncpa [#allocation4], 1

</llo_original>
